<compile_context>
chip_gen: v7x
topology: tpu7x:2x2x1
jax: 0.10.0
libtpu: 0.0.40
codegen_flags: <defaults>
</compile_context>

<pallas_src>
import jax
import jax.numpy as jnp
from jax.experimental import pallas as pl
from jax.experimental.pallas import tpu as pltpu

LANE = 128
SUBLANE = 8

IN_FEATURES = 3
HIDDEN = 10
OUT_FEATURES = 4

HID_PAD = LANE          # 10 -> 128 (lane-dense hidden activations)
MAX_TB = 2048           # row-tile cap
MIN_SPLIT_ROWS = 1024   # only force >=2 grid steps (v7x megacore) above this


def _round_up(n, m):
    return (n + m - 1) // m * m


def _choose_tb(batch):
    batch_r = _round_up(batch, SUBLANE)
    tb = min(MAX_TB, batch_r)
    # v7x: when there is enough work, keep at least 2 grid steps so the
    # "parallel" batch axis can shard across both TensorCores.
    if batch_r >= MIN_SPLIT_ROWS:
        half = _round_up((batch_r + 1) // 2, SUBLANE)
        tb = min(tb, half)
    return tb


def mlp_kernel(x_ref, w1_ref, b1_ref, w2_ref, b2_ref, o_ref):
    # Hidden layer: Linear(3, 10) + ReLU on (tb, 3) x (3, 128) tiles.
    h = jnp.dot(x_ref[...], w1_ref[...],
                preferred_element_type=jnp.float32) + b1_ref[...]
    h = jnp.maximum(h, 0.0)
    # Output layer: Linear(10, 4) on (tb, 128) x (128, 4) tiles.
    # Narrow (tb, 4) store: masked vst, but ~32x less HBM writeback.
    o_ref[...] = (jnp.dot(h, w2_ref[...],
                          preferred_element_type=jnp.float32)
                  + b2_ref[...]).astype(o_ref.dtype)


def prepare_params(w1, b1, w2, b2):
    """Pad parameters to TPU-friendly layouts ONCE (hoisted out of the fwd path)."""
    w1_p = jnp.zeros((IN_FEATURES, HID_PAD), jnp.float32).at[:, :HIDDEN].set(w1)
    b1_p = jnp.zeros((1, HID_PAD), jnp.float32).at[:, :HIDDEN].set(
        b1.reshape(1, HIDDEN))
    w2_p = jnp.zeros((HID_PAD, OUT_FEATURES), jnp.float32).at[:HIDDEN, :].set(w2)
    b2_p = b2.reshape(1, OUT_FEATURES).astype(jnp.float32)
    return w1_p, b1_p, w2_p, b2_p


def net_forward(x, params):
    w1_p, b1_p, w2_p, b2_p = params
    batch = x.shape[0]

    tb = _choose_tb(batch)
    batch_p = _round_up(batch, tb)

    # Only pad rows (to a multiple of the row tile); feature dim stays at 3.
    if batch_p != batch:
        x_in = jnp.zeros((batch_p, IN_FEATURES), jnp.float32).at[:batch].set(x)
    else:
        x_in = x.astype(jnp.float32)

    grid = (batch_p // tb,)

    out_p = pl.pallas_call(
        mlp_kernel,
        out_shape=jax.ShapeDtypeStruct((batch_p, OUT_FEATURES), jnp.float32),
        grid_spec=pltpu.PrefetchScalarGridSpec(
            num_scalar_prefetch=0,
            grid=grid,
            in_specs=[
                pl.BlockSpec((tb, IN_FEATURES), lambda i: (i, 0)),          # x tile
                pl.BlockSpec((IN_FEATURES, HID_PAD), lambda i: (0, 0)),     # w1 (resident)
                pl.BlockSpec((1, HID_PAD), lambda i: (0, 0)),               # b1 (resident)
                pl.BlockSpec((HID_PAD, OUT_FEATURES), lambda i: (0, 0)),    # w2 (resident)
                pl.BlockSpec((1, OUT_FEATURES), lambda i: (0, 0)),          # b2 (resident)
            ],
            out_specs=pl.BlockSpec((tb, OUT_FEATURES), lambda i: (i, 0)),
        ),
        compiler_params=pltpu.CompilerParams(
            # Batch axis is embarrassingly parallel -> megacore sharding on
            # multi-TC chips (v7x); harmless at a single grid point.
            dimension_semantics=("parallel",),
        ),
    )(x_in, w1_p, b1_p, w2_p, b2_p)

    # Trivial contiguous row trim (identity when batch is tile-aligned).
    return out_p if batch_p == batch else out_p[:batch]


def init_linear(key, fan_in, fan_out):
    # Matches torch.nn.Linear default init: U(-1/sqrt(fan_in), 1/sqrt(fan_in)).
    kw, kb = jax.random.split(key)
    bound = 1.0 / jnp.sqrt(jnp.float32(fan_in))
    w = jax.random.uniform(kw, (fan_in, fan_out), jnp.float32, -bound, bound)
    b = jax.random.uniform(kb, (1, fan_out), jnp.float32, -bound, bound)
    return w, b


def _reference(x, w1, b1, w2, b2):
    return jnp.maximum(x @ w1 + b1, 0.0) @ w2 + b2


if __name__ == "__main__":
    key = jax.random.PRNGKey(0)
    k_x, k_x2, k_l1, k_l2 = jax.random.split(key, 4)

    w1, b1 = init_linear(k_l1, IN_FEATURES, HIDDEN)
    w2, b2 = init_linear(k_l2, HIDDEN, OUT_FEATURES)
    params = prepare_params(w1, b1, w2, b2)   # padded once, reused across calls

    # Primary small-shape check (batch=8, single grid step).
    batch = 8
    x = jax.random.normal(k_x, (batch, IN_FEATURES), jnp.float32)
    out = jax.block_until_ready(net_forward(x, params))
    ref = _reference(x, w1, b1, w2, b2)
    assert out.shape == (batch, OUT_FEATURES)
    assert jnp.allclose(out, ref, atol=1e-5, rtol=1e-5)

    # Secondary check exercising the row-padding / trim path (batch not a
    # multiple of the sublane tile).
    batch2 = 53
    x2 = jax.random.normal(k_x2, (batch2, IN_FEATURES), jnp.float32)
    out2 = jax.block_until_ready(net_forward(x2, params))
    ref2 = _reference(x2, w1, b1, w2, b2)
    assert out2.shape == (batch2, OUT_FEATURES)
    assert jnp.allclose(out2, ref2, atol=1e-5, rtol=1e-5)

    print("KERNEL_OK")
</pallas_src>

<mosaic_0001>
module attributes {stable_mosaic.version = 11 : i64} {
  func.func @mlp_kernel(%arg0: i32, %arg1: memref<8x3xf32, #tpu.memory_space<vmem>>, %arg2: memref<3x128xf32, #tpu.memory_space<vmem>>, %arg3: memref<1x128xf32, #tpu.memory_space<vmem>>, %arg4: memref<128x4xf32, #tpu.memory_space<vmem>>, %arg5: memref<1x4xf32, #tpu.memory_space<vmem>>, %arg6: memref<8x4xf32, #tpu.memory_space<vmem>>) attributes {dimension_semantics = [#tpu.dimension_semantics<parallel>], iteration_bounds = array<i64: 1>, scalar_prefetch = 0 : i64, scratch_operands = 0 : i64, tpu.core_type = #tpu.core_type<tc>, window_params = [{transform_indices = @transform_0, window_bounds = array<i64: 8, 3>}, {pipeline_mode = #tpu.pipeline_mode<synchronous>, transform_indices = @transform_1, window_bounds = array<i64: 3, 128>}, {pipeline_mode = #tpu.pipeline_mode<synchronous>, transform_indices = @transform_2, window_bounds = array<i64: 1, 128>}, {pipeline_mode = #tpu.pipeline_mode<synchronous>, transform_indices = @transform_3, window_bounds = array<i64: 128, 4>}, {pipeline_mode = #tpu.pipeline_mode<synchronous>, transform_indices = @transform_4, window_bounds = array<i64: 1, 4>}, {transform_indices = @transform_5, window_bounds = array<i64: 8, 4>}]} {
    %c0 = arith.constant 0 : index
    %c0_0 = arith.constant 0 : index
    %0 = vector.load %arg1[%c0, %c0_0] : memref<8x3xf32, #tpu.memory_space<vmem>>, vector<8x3xf32>
    %c0_1 = arith.constant 0 : index
    %c0_2 = arith.constant 0 : index
    %1 = vector.load %arg2[%c0_1, %c0_2] : memref<3x128xf32, #tpu.memory_space<vmem>>, vector<3x128xf32>
    %cst = arith.constant dense<0.000000e+00> : vector<8x128xf32>
    %2 = tpu.matmul %0, %1, %cst {dimension_numbers = #tpu.dot_dimension_numbers<[1], [0], [0], [1], [0, 0, 1, 1], [], []>} : vector<8x3xf32>, vector<3x128xf32>, vector<8x128xf32> -> vector<8x128xf32>
    %c0_3 = arith.constant 0 : index
    %c0_4 = arith.constant 0 : index
    %3 = vector.load %arg3[%c0_3, %c0_4] : memref<1x128xf32, #tpu.memory_space<vmem>>, vector<1x128xf32>
    %4 = vector.broadcast %3 : vector<1x128xf32> to vector<8x128xf32>
    %5 = arith.addf %2, %4 : vector<8x128xf32>
    %cst_5 = arith.constant 0.000000e+00 : f32
    %6 = vector.broadcast %cst_5 : f32 to vector<8x128xf32>
    %7 = arith.maximumf %5, %6 : vector<8x128xf32>
    %c0_6 = arith.constant 0 : index
    %c0_7 = arith.constant 0 : index
    %8 = vector.load %arg4[%c0_6, %c0_7] : memref<128x4xf32, #tpu.memory_space<vmem>>, vector<128x4xf32>
    %cst_8 = arith.constant dense<0.000000e+00> : vector<8x4xf32>
    %9 = tpu.matmul %7, %8, %cst_8 {dimension_numbers = #tpu.dot_dimension_numbers<[1], [0], [0], [1], [0, 0, 1, 1], [], []>} : vector<8x128xf32>, vector<128x4xf32>, vector<8x4xf32> -> vector<8x4xf32>
    %c0_9 = arith.constant 0 : index
    %c0_10 = arith.constant 0 : index
    %10 = vector.load %arg5[%c0_9, %c0_10] : memref<1x4xf32, #tpu.memory_space<vmem>>, vector<1x4xf32>
    %11 = vector.broadcast %10 : vector<1x4xf32> to vector<8x4xf32>
    %12 = arith.addf %9, %11 : vector<8x4xf32>
    %c0_11 = arith.constant 0 : index
    %c0_12 = arith.constant 0 : index
    %13 = vector.load %arg6[%c0_11, %c0_12] : memref<8x4xf32, #tpu.memory_space<vmem>>, vector<8x4xf32>
    tpu.vector_store %arg6[%c0_11, %c0_12], %12 {strides = array<i32>} : memref<8x4xf32, #tpu.memory_space<vmem>>, vector<8x4xf32>,
    return
  }
  func.func @transform_0(%arg0: i32) -> (i32, i32) {
    %c0_i32 = arith.constant 0 : i32
    %c0_i32_0 = arith.constant 0 : i32
    return %arg0, %c0_i32 : i32, i32
  }
  func.func @transform_1(%arg0: i32) -> (i32, i32) {
    %c0_i32 = arith.constant 0 : i32
    %c0_i32_0 = arith.constant 0 : i32
    %c0_i32_1 = arith.constant 0 : i32
    return %c0_i32, %c0_i32_0 : i32, i32
  }
  func.func @transform_2(%arg0: i32) -> (i32, i32) {
    %c0_i32 = arith.constant 0 : i32
    %c0_i32_0 = arith.constant 0 : i32
    %c0_i32_1 = arith.constant 0 : i32
    return %c0_i32, %c0_i32_0 : i32, i32
  }
  func.func @transform_3(%arg0: i32) -> (i32, i32) {
    %c0_i32 = arith.constant 0 : i32
    %c0_i32_0 = arith.constant 0 : i32
    %c0_i32_1 = arith.constant 0 : i32
    return %c0_i32, %c0_i32_0 : i32, i32
  }
  func.func @transform_4(%arg0: i32) -> (i32, i32) {
    %c0_i32 = arith.constant 0 : i32
    %c0_i32_0 = arith.constant 0 : i32
    %c0_i32_1 = arith.constant 0 : i32
    return %c0_i32, %c0_i32_0 : i32, i32
  }
  func.func @transform_5(%arg0: i32) -> (i32, i32) {
    %c0_i32 = arith.constant 0 : i32
    %c0_i32_0 = arith.constant 0 : i32
    return %arg0, %c0_i32 : i32, i32
  }
}

</mosaic_0001>

<llo_original>
// kernel: tpu_custom_call.1
$region0: #{tpu_custom_call.1}
  #allocation0 [shape = 'u32[]', space=smem, size = 0x4, offset = 0x4, fixed_abs, tag = 'smem constant byte address 0x4 - core index']
  #allocation1 [shape = 'u32[144,128]{1,0:T(1,128)}', space=vmem, size = 0x12000, scoped, tag = 'internal scratch']
  %s0 = inlined_call_operand.vmem [shape: f32[8,3], index: 0, kind: input, shape index: {}]
  %s1 = inlined_call_operand.vmem [shape: f32[3,128], index: 1, kind: input, shape index: {}]
  %s2 = inlined_call_operand.vmem [shape: f32[1,128], index: 2, kind: input, shape index: {}]
  %s3 = inlined_call_operand.vmem [shape: f32[128,4], index: 3, kind: input, shape index: {}]
  %s4 = inlined_call_operand.vmem [shape: f32[1,4], index: 4, kind: input, shape index: {}]
  %s5 = inlined_call_operand.vmem [shape: f32[8,4], index: 5, kind: output, shape index: {}]
  %s6 = sld [smem:[#allocation0]]
  $region30: #{tpu_custom_call.1} parent=0
    _
  %s8 = ssub.s32 1, %s6
  %s9 = scalar_select 0, %s8, %s6
  // Predicated region
  $region2: #{tpu_custom_call.1} parent=0 // pred_check
    _
  $region3: #{tpu_custom_call.1} parent=0 // pred_check_branch
    %11 = sbr.rel (0) target = $region5
  $region4: #{tpu_custom_call.1} parent=0 // pred_region
    _
  $region5: #{tpu_custom_call.1} parent=0 // pred_fallthru
    _
  // Predicated region
  $region6: #{tpu_custom_call.1} parent=0 // pred_check
    _
  $region7: #{tpu_custom_call.1} parent=0 // pred_check_branch
    %13 = sbr.rel (0) target = $region9
  $region8: #{tpu_custom_call.1} parent=0 // pred_region
    _
  $region9: #{tpu_custom_call.1} parent=0 // pred_fallthru
    _
  // Predicated region
  $region10: #{tpu_custom_call.1} parent=0 // pred_check
    _
  $region11: #{tpu_custom_call.1} parent=0 // pred_check_branch
    %15 = sbr.rel (0) target = $region13
  $region12: #{tpu_custom_call.1} parent=0 // pred_region
    _
  $region13: #{tpu_custom_call.1} parent=0 // pred_fallthru
    _
  // Predicated region
  $region14: #{tpu_custom_call.1} parent=0 // pred_check
    _
  $region15: #{tpu_custom_call.1} parent=0 // pred_check_branch
    %17 = sbr.rel (0) target = $region17
  $region16: #{tpu_custom_call.1} parent=0 // pred_region
    _
  $region17: #{tpu_custom_call.1} parent=0 // pred_fallthru
    _
  // Predicated region
  $region18: #{tpu_custom_call.1} parent=0 // pred_check
    _
  $region19: #{tpu_custom_call.1} parent=0 // pred_check_branch
    %19 = sbr.rel (0) target = $region21
  $region20: #{tpu_custom_call.1} parent=0 // pred_region
    _
  $region21: #{tpu_custom_call.1} parent=0 // pred_fallthru
    _
  %v20 = vld [vmem:[%s0] sm:$0xff]
  %v21 = vld [vmem:[%s1] sm:$0x7]
  %v22 = vld [vmem:[%s2] sm:$0x1]
  %v24 = vlaneseq
  %v25 = vshrl.u32 %v24, 7
  %v26 = vsub.s32 0, %v25
  %v27 = vrot.slane %v22, %v26
  %vm29 = vcmask 23552
  %v31 = vsel %vm29, %v20, 0
  %vm33 = vcmask 1042432
  %v35 = vsel %vm33, %v21, 0
  %37 = vmatprep.subr.mxu0 0.0
  %38 = vmatpush1.msra.mxu0 %v35
  %39 = vmatprep.subr.mxu0 0.0
  %40 = vmatpush1.msra.mxu0 0.0
  %41 = vmatprep.subr.mxu0 0.0
  %42 = vmatpush1.msra.mxu0 0.0
  %43 = vmatprep.subr.mxu0 0.0
  %44 = vmatpush1.msra.mxu0 0.0
  %45 = vmatprep.subr.mxu0 0.0
  %46 = vmatpush1.msra.mxu0 0.0
  %47 = vmatprep.subr.mxu0 0.0
  %48 = vmatpush1.msra.mxu0 0.0
  %49 = vmatprep.subr.mxu0 0.0
  %50 = vmatpush1.msra.mxu0 0.0
  %51 = vmatprep.subr.mxu0 0.0
  %52 = vmatpush1.msra.mxu0 0.0
  %53 = vmatprep.subr.mxu0 0.0
  %54 = vmatpush1.msra.mxu0 0.0
  %55 = vmatprep.subr.mxu0 0.0
  %56 = vmatpush1.msra.mxu0 0.0
  %57 = vmatprep.subr.mxu0 0.0
  %58 = vmatpush1.msra.mxu0 0.0
  %59 = vmatprep.subr.mxu0 0.0
  %60 = vmatpush1.msra.mxu0 0.0
  %61 = vmatprep.subr.mxu0 0.0
  %62 = vmatpush1.msra.mxu0 0.0
  %63 = vmatprep.subr.mxu0 0.0
  %64 = vmatpush1.msra.mxu0 0.0
  %65 = vmatprep.subr.mxu0 0.0
  %66 = vmatpush1.msra.mxu0 0.0
  %67 = vmatprep.subr.mxu0 0.0
  %68 = vmatpush1.msra.mxu0 0.0
  %69 = vmatprep.subr.mxu0 0.0
  %70 = vmatpush1.msra.mxu0 0.0
  %71 = vmatprep.subr.mxu0 0.0
  %72 = vmatpush1.msra.mxu0 0.0
  %73 = vmatprep.subr.mxu0 0.0
  %74 = vmatpush1.msra.mxu0 0.0
  %75 = vmatprep.subr.mxu0 0.0
  %76 = vmatpush1.msra.mxu0 0.0
  %77 = vmatprep.subr.mxu0 0.0
  %78 = vmatpush1.msra.mxu0 0.0
  %79 = vmatprep.subr.mxu0 0.0
  %80 = vmatpush1.msra.mxu0 0.0
  %81 = vmatprep.subr.mxu0 0.0
  %82 = vmatpush1.msra.mxu0 0.0
  %83 = vmatprep.subr.mxu0 0.0
  %84 = vmatpush1.msra.mxu0 0.0
  %85 = vmatprep.subr.mxu0 0.0
  %86 = vmatpush1.msra.mxu0 0.0
  %87 = vmatprep.subr.mxu0 0.0
  %88 = vmatpush1.msra.mxu0 0.0
  %89 = vmatprep.subr.mxu0 0.0
  %90 = vmatpush1.msra.mxu0 0.0
  %91 = vmatprep.subr.mxu0 0.0
  %92 = vmatpush1.msra.mxu0 0.0
  %93 = vmatprep.subr.mxu0 0.0
  %94 = vmatpush1.msra.mxu0 0.0
  %95 = vmatprep.subr.mxu0 0.0
  %96 = vmatpush1.msra.mxu0 0.0
  %97 = vmatprep.subr.mxu0 0.0
  %98 = vmatpush1.msra.mxu0 0.0
  %99 = vmatprep.subr.mxu0 0.0
  %100 = vmatpush1.msra.mxu0 0.0
  %101 = vmatprep.mubr.f32.mxu0 0.0
  %102 = vmatmul.mubr.f32.gmra.mrb[0].mxu0 %v31
  %v103 = vpop.f32.mrb[0].mxu0
  %v104 = vadd.f32 %v27, %v103
  %v105 = vpop.f32.mrb[0].mxu0
  %106 = vdwg.mxu0
  %v107 = vmax.f32 %v104, 0.0
  %v108 = vld [vmem:[%s3] sm:$0xff]
  %v109 = vld [vmem:[%s3 + $0x8] sm:$0xff]
  %v110 = vld [vmem:[%s3 + $0x10] sm:$0xff]
  %v111 = vld [vmem:[%s3 + $0x18] sm:$0xff]
  %v112 = vld [vmem:[%s3 + $0x20] sm:$0xff]
  %v113 = vld [vmem:[%s3 + $0x28] sm:$0xff]
  %v114 = vld [vmem:[%s3 + $0x30] sm:$0xff]
  %v115 = vld [vmem:[%s3 + $0x38] sm:$0xff]
  %v116 = vld [vmem:[%s3 + $0x40] sm:$0xff]
  %v117 = vld [vmem:[%s3 + $0x48] sm:$0xff]
  %v118 = vld [vmem:[%s3 + $0x50] sm:$0xff]
  %v119 = vld [vmem:[%s3 + $0x58] sm:$0xff]
  %v120 = vld [vmem:[%s3 + $0x60] sm:$0xff]
  %v121 = vld [vmem:[%s3 + $0x68] sm:$0xff]
  %v122 = vld [vmem:[%s3 + $0x70] sm:$0xff]
  %v123 = vld [vmem:[%s3 + $0x78] sm:$0xff]
  %v124 = vld [vmem:[%s4] sm:$0x1]
  %v126 = vlaneseq
  %v127 = vshrl.u32 %v126, 7
  %v128 = vsub.s32 0, %v127
  %v129 = vrot.slane %v124, %v128
  %131 = vmatprep.subr.mxu0 0.0
  %132 = vmatpush1.msra.mxu0 %v108
  %133 = vmatprep.subr.mxu0 0.0
  %134 = vmatpush1.msra.mxu0 %v109
  %135 = vmatprep.subr.mxu0 0.0
  %136 = vmatpush1.msra.mxu0 %v110
  %137 = vmatprep.subr.mxu0 0.0
  %138 = vmatpush1.msra.mxu0 %v111
  %139 = vmatprep.subr.mxu0 0.0
  %140 = vmatpush1.msra.mxu0 %v112
  %141 = vmatprep.subr.mxu0 0.0
  %142 = vmatpush1.msra.mxu0 %v113
  %143 = vmatprep.subr.mxu0 0.0
  %144 = vmatpush1.msra.mxu0 %v114
  %145 = vmatprep.subr.mxu0 0.0
  %146 = vmatpush1.msra.mxu0 %v115
  %147 = vmatprep.subr.mxu0 0.0
  %148 = vmatpush1.msra.mxu0 %v116
  %149 = vmatprep.subr.mxu0 0.0
  %150 = vmatpush1.msra.mxu0 %v117
  %151 = vmatprep.subr.mxu0 0.0
  %152 = vmatpush1.msra.mxu0 %v118
  %153 = vmatprep.subr.mxu0 0.0
  %154 = vmatpush1.msra.mxu0 %v119
  %155 = vmatprep.subr.mxu0 0.0
  %156 = vmatpush1.msra.mxu0 %v120
  %157 = vmatprep.subr.mxu0 0.0
  %158 = vmatpush1.msra.mxu0 %v121
  %159 = vmatprep.subr.mxu0 0.0
  %160 = vmatpush1.msra.mxu0 %v122
  %161 = vmatprep.subr.mxu0 0.0
  %162 = vmatpush1.msra.mxu0 %v123
  %163 = vmatprep.subr.mxu0 0.0
  %164 = vmatpush1.msra.mxu0 0.0
  %165 = vmatprep.subr.mxu0 0.0
  %166 = vmatpush1.msra.mxu0 0.0
  %167 = vmatprep.subr.mxu0 0.0
  %168 = vmatpush1.msra.mxu0 0.0
  %169 = vmatprep.subr.mxu0 0.0
  %170 = vmatpush1.msra.mxu0 0.0
  %171 = vmatprep.subr.mxu0 0.0
  %172 = vmatpush1.msra.mxu0 0.0
  %173 = vmatprep.subr.mxu0 0.0
  %174 = vmatpush1.msra.mxu0 0.0
  %175 = vmatprep.subr.mxu0 0.0
  %176 = vmatpush1.msra.mxu0 0.0
  %177 = vmatprep.subr.mxu0 0.0
  %178 = vmatpush1.msra.mxu0 0.0
  %179 = vmatprep.subr.mxu0 0.0
  %180 = vmatpush1.msra.mxu0 0.0
  %181 = vmatprep.subr.mxu0 0.0
  %182 = vmatpush1.msra.mxu0 0.0
  %183 = vmatprep.subr.mxu0 0.0
  %184 = vmatpush1.msra.mxu0 0.0
  %185 = vmatprep.subr.mxu0 0.0
  %186 = vmatpush1.msra.mxu0 0.0
  %187 = vmatprep.subr.mxu0 0.0
  %188 = vmatpush1.msra.mxu0 0.0
  %189 = vmatprep.subr.mxu0 0.0
  %190 = vmatpush1.msra.mxu0 0.0
  %191 = vmatprep.subr.mxu0 0.0
  %192 = vmatpush1.msra.mxu0 0.0
  %193 = vmatprep.subr.mxu0 0.0
  %194 = vmatpush1.msra.mxu0 0.0
  %195 = vmatprep.mubr.f32.mxu0 0.0
  %196 = vmatmul.mubr.f32.gmra.mrb[0].mxu0 %v107
  %v197 = vpop.f32.mrb[0].mxu0
  %v198 = vadd.f32 %v129, %v197
  %v199 = vpop.f32.mrb[0].mxu0
  %200 = vdwg.mxu0
  %vm201 = vcmask 31744
  %202 = vst.msk [vmem:[%s5] sm:$0xff] %vm201, %v198
  // Predicated region
  $region22: #{tpu_custom_call.1} parent=0 // pred_check
    _
  $region23: #{tpu_custom_call.1} parent=0 // pred_check_branch
    %204 = sbr.rel (0) target = $region25
  $region24: #{tpu_custom_call.1} parent=0 // pred_region
    _
  $region25: #{tpu_custom_call.1} parent=0 // pred_fallthru
    _
  // Predicated region
  $region26: #{tpu_custom_call.1} parent=0 // pred_check
    _
  $region27: #{tpu_custom_call.1} parent=0 // pred_check_branch
    %206 = sbr.rel (0) target = $region29
  $region28: #{tpu_custom_call.1} parent=0 // pred_region
    _
  $region29: #{tpu_custom_call.1} parent=0 // pred_fallthru
    _

</llo_original>
